<compile_context>
chip_gen: v7x
topology: tpu7x:2x2x1
jax: 0.10.0
libtpu: 0.0.40
codegen_flags: <defaults>
</compile_context>

<pallas_src>
import jax
import jax.numpy as jnp
from jax.experimental import pallas as pl
from jax.experimental.pallas import tpu as pltpu

CRITIC_HIDDEN_LAYER_1 = 256
CRITIC_HIDDEN_LAYER_2 = 128
MAX_TILE_B = 1024            # batch tile cap (VMEM use ~ a few MiB/step)


def _round_up(n, m):
    return ((n + m - 1) // m) * m


def critic_kernel(x_ref, a_ref, w1_ref, b1_ref, w2h_ref, w2a_ref, b2_ref,
                  w3_ref, b3_ref, out_ref):
    # fc1: (tb, s_dim) @ (s_dim, h1) on the MXU, bf16 operands / f32 accum.
    x = x_ref[...].astype(jnp.bfloat16)
    h1 = jnp.dot(x, w1_ref[...], preferred_element_type=jnp.float32) + b1_ref[...]
    h1 = jnp.maximum(h1, 0.0)                                   # ReLU (f32, VPU)

    # fc2 hidden part: (tb, h1) @ (h1, h2) on the MXU.
    h2 = (jnp.dot(h1.astype(jnp.bfloat16), w2h_ref[...],
                  preferred_element_type=jnp.float32)
          + b2_ref[...])
    # fc2 action part: K = a_dim (tiny) -> rank-1 mul-adds on the VPU in f32.
    a = a_ref[...]                    # (tb, a_dim) f32
    w2a = w2a_ref[...]                # (a_dim, h2) f32
    for k in range(a.shape[1]):       # a_dim is static and small (e.g. 4)
        h2 = h2 + a[:, k:k + 1] * w2a[k:k + 1, :]
    h2 = jnp.maximum(h2, 0.0)                                   # ReLU (f32, VPU)

    # fc3: single output column -> f32 VPU multiply + lane reduction.
    q = jnp.sum(h2 * w3_ref[...], axis=-1, keepdims=True) + b3_ref[...]
    out_ref[...] = q                                            # (tb, 1) store


def _pick_tile(batch, tile_cap=MAX_TILE_B):
    """Tile the batch so there are >= 2 grid steps when batch allows it
    (keeps both v7x TensorCores busy), capped at tile_cap rows."""
    b8 = _round_up(batch, 8)
    half = _round_up(pl.cdiv(b8, 2), 8)
    return max(8, min(tile_cap, half))


def critic_forward(state, action, params, tile_cap=MAX_TILE_B):
    """state: (B, state_num*agent_num) f32, action: (B, action_num*agent_num) f32 -> (B, 1) f32."""
    w1, b1, w2h, w2a, b2, w3, b3 = params
    batch, s_dim = state.shape
    a_dim = action.shape[1]
    h1 = w1.shape[1]
    h2 = w2h.shape[1]

    tb = _pick_tile(batch, tile_cap)
    padded = _round_up(batch, tb)
    if padded != batch:
        state = jnp.pad(state, ((0, padded - batch), (0, 0)))
        action = jnp.pad(action, ((0, padded - batch), (0, 0)))
    grid = (padded // tb,)

    flops = 2 * padded * (s_dim * h1 + h1 * h2 + a_dim * h2 + h2 * 1)
    param_bytes = sum(int(p.size) * p.dtype.itemsize for p in params)
    bytes_accessed = (int(state.size) + int(action.size)) * 4 + padded * 4 + param_bytes
    cost = pl.CostEstimate(flops=int(flops), transcendentals=0,
                           bytes_accessed=int(bytes_accessed))

    out = pl.pallas_call(
        critic_kernel,
        out_shape=jax.ShapeDtypeStruct((padded, 1), jnp.float32),
        grid_spec=pltpu.PrefetchScalarGridSpec(
            num_scalar_prefetch=0,
            grid=grid,
            in_specs=[
                pl.BlockSpec((tb, s_dim), lambda i: (i, 0)),     # state tile (streamed)
                pl.BlockSpec((tb, a_dim), lambda i: (i, 0)),     # action tile (streamed)
                pl.BlockSpec((s_dim, h1), lambda i: (0, 0)),     # w1   bf16, resident
                pl.BlockSpec((1, h1), lambda i: (0, 0)),         # b1   f32
                pl.BlockSpec((h1, h2), lambda i: (0, 0)),        # w2h  bf16, resident
                pl.BlockSpec((a_dim, h2), lambda i: (0, 0)),     # w2a  f32 (VPU path)
                pl.BlockSpec((1, h2), lambda i: (0, 0)),         # b2   f32
                pl.BlockSpec((1, h2), lambda i: (0, 0)),         # w3 row, f32 (VPU path)
                pl.BlockSpec((1, 1), lambda i: (0, 0)),          # b3   f32
            ],
            out_specs=pl.BlockSpec((tb, 1), lambda i: (i, 0)),
        ),
        compiler_params=pltpu.CompilerParams(
            dimension_semantics=("parallel",),
        ),
        cost_estimate=cost,
    )(state, action, w1, b1, w2h, w2a, b2, w3, b3)

    return out if padded == batch else out[:batch]


def init_critic_params(key, s_dim, a_dim,
                       h1=CRITIC_HIDDEN_LAYER_1, h2=CRITIC_HIDDEN_LAYER_2):
    """Mirror MADDPGCritic.reset_parameters().

    hidden_init(layer) uses weight.size()[0] == out_features, so fc1/fc2 weight
    limits are 1/sqrt(out_features); biases keep PyTorch's default Linear init
    (uniform +/- 1/sqrt(in_features)); fc3 weights are uniform(-3e-3, 3e-3).
    Weights are stored (in, out); fc2 is split into hidden/action blocks.
    w1/w2h are stored in bf16 (MXU operands); w2a/w3/biases stay f32 (VPU path).
    """
    ks = jax.random.split(key, 7)

    def uni(k, shape, lim):
        return jax.random.uniform(k, shape, jnp.float32, -lim, lim)

    w1 = uni(ks[0], (s_dim, h1), 1.0 / (h1 ** 0.5))
    b1 = uni(ks[1], (1, h1), 1.0 / (s_dim ** 0.5))
    w2h = uni(ks[2], (h1, h2), 1.0 / (h2 ** 0.5))
    w2a = uni(ks[3], (a_dim, h2), 1.0 / (h2 ** 0.5))
    b2 = uni(ks[4], (1, h2), 1.0 / ((h1 + a_dim) ** 0.5))
    w3 = uni(ks[5], (1, h2), 3e-3)                    # fc3 weight stored as a row
    b3 = uni(ks[6], (1, 1), 1.0 / (h2 ** 0.5))

    return (w1.astype(jnp.bfloat16), b1,
            w2h.astype(jnp.bfloat16), w2a, b2, w3, b3)


def critic_ref(state, action, params):
    """Pure-JAX f32 reference (same math; bf16-stored weights widened to f32)."""
    w1, b1, w2h, w2a, b2, w3, b3 = params
    h1 = jnp.maximum(state @ w1.astype(jnp.float32) + b1, 0.0)
    h2 = jnp.maximum(h1 @ w2h.astype(jnp.float32) + action @ w2a + b2, 0.0)
    return h2 @ w3.T + b3


# TODO(synk): for the full MADDPG update, stack both agents' (and local+target)
# critic weights column-wise and emit all Q heads from one pallas_call to fill
# the 256-wide MXU and amortize launch/weight-DMA overhead.


if __name__ == "__main__":
    key = jax.random.PRNGKey(0)
    k_param, k_s, k_a = jax.random.split(key, 3)

    # Tennis env: 24-dim state, 2-dim action, 2 agents (joint critic input).
    state_num, action_num, agent_num, batch = 24, 2, 2, 8
    s_dim = state_num * agent_num    # 48
    a_dim = action_num * agent_num   # 4

    params = init_critic_params(k_param, s_dim, a_dim)
    state = jax.random.normal(k_s, (batch, s_dim), jnp.float32)
    action = jax.random.uniform(k_a, (batch, a_dim), jnp.float32, -1.0, 1.0)

    out = jax.block_until_ready(critic_forward(state, action, params))
    ref = critic_ref(state, action, params)

    assert out.shape == (batch, 1), out.shape
    max_err = float(jnp.max(jnp.abs(out - ref)))
    assert max_err < 3e-2, f"max abs err {max_err}"  # bf16 activation rounding tolerance
    print("KERNEL_OK")
</pallas_src>

<mosaic_0001>
module attributes {stable_mosaic.version = 11 : i64} {
  func.func @critic_kernel(%arg0: i32, %arg1: memref<8x48xf32, #tpu.memory_space<vmem>>, %arg2: memref<8x4xf32, #tpu.memory_space<vmem>>, %arg3: memref<48x256xbf16, #tpu.memory_space<vmem>>, %arg4: memref<1x256xf32, #tpu.memory_space<vmem>>, %arg5: memref<256x128xbf16, #tpu.memory_space<vmem>>, %arg6: memref<4x128xf32, #tpu.memory_space<vmem>>, %arg7: memref<1x128xf32, #tpu.memory_space<vmem>>, %arg8: memref<1x128xf32, #tpu.memory_space<vmem>>, %arg9: memref<1x1xf32, #tpu.memory_space<vmem>>, %arg10: memref<8x1xf32, #tpu.memory_space<vmem>>) attributes {dimension_semantics = [#tpu.dimension_semantics<parallel>], iteration_bounds = array<i64: 1>, scalar_prefetch = 0 : i64, scratch_operands = 0 : i64, tpu.core_type = #tpu.core_type<tc>, window_params = [{transform_indices = @transform_0, window_bounds = array<i64: 8, 48>}, {transform_indices = @transform_1, window_bounds = array<i64: 8, 4>}, {pipeline_mode = #tpu.pipeline_mode<synchronous>, transform_indices = @transform_2, window_bounds = array<i64: 48, 256>}, {pipeline_mode = #tpu.pipeline_mode<synchronous>, transform_indices = @transform_3, window_bounds = array<i64: 1, 256>}, {pipeline_mode = #tpu.pipeline_mode<synchronous>, transform_indices = @transform_4, window_bounds = array<i64: 256, 128>}, {pipeline_mode = #tpu.pipeline_mode<synchronous>, transform_indices = @transform_5, window_bounds = array<i64: 4, 128>}, {pipeline_mode = #tpu.pipeline_mode<synchronous>, transform_indices = @transform_6, window_bounds = array<i64: 1, 128>}, {pipeline_mode = #tpu.pipeline_mode<synchronous>, transform_indices = @transform_7, window_bounds = array<i64: 1, 128>}, {pipeline_mode = #tpu.pipeline_mode<synchronous>, transform_indices = @transform_8, window_bounds = array<i64: 1, 1>}, {transform_indices = @transform_9, window_bounds = array<i64: 8, 1>}]} {
    %c0 = arith.constant 0 : index
    %c0_0 = arith.constant 0 : index
    %0 = vector.load %arg1[%c0, %c0_0] : memref<8x48xf32, #tpu.memory_space<vmem>>, vector<8x48xf32>
    %1 = arith.truncf %0 : vector<8x48xf32> to vector<8x48xbf16>
    %c0_1 = arith.constant 0 : index
    %c0_2 = arith.constant 0 : index
    %2 = vector.load %arg3[%c0_1, %c0_2] : memref<48x256xbf16, #tpu.memory_space<vmem>>, vector<48x256xbf16>
    %cst = arith.constant dense<0.000000e+00> : vector<8x256xf32>
    %3 = tpu.matmul %1, %2, %cst {dimension_numbers = #tpu.dot_dimension_numbers<[1], [0], [0], [1], [0, 0, 1, 1], [], []>} : vector<8x48xbf16>, vector<48x256xbf16>, vector<8x256xf32> -> vector<8x256xf32>
    %c0_3 = arith.constant 0 : index
    %c0_4 = arith.constant 0 : index
    %4 = vector.load %arg4[%c0_3, %c0_4] : memref<1x256xf32, #tpu.memory_space<vmem>>, vector<1x256xf32>
    %5 = vector.broadcast %4 : vector<1x256xf32> to vector<8x256xf32>
    %6 = arith.addf %3, %5 : vector<8x256xf32>
    %cst_5 = arith.constant 0.000000e+00 : f32
    %7 = vector.broadcast %cst_5 : f32 to vector<8x256xf32>
    %8 = arith.maximumf %6, %7 : vector<8x256xf32>
    %9 = arith.truncf %8 : vector<8x256xf32> to vector<8x256xbf16>
    %c0_6 = arith.constant 0 : index
    %c0_7 = arith.constant 0 : index
    %10 = vector.load %arg5[%c0_6, %c0_7] : memref<256x128xbf16, #tpu.memory_space<vmem>>, vector<256x128xbf16>
    %cst_8 = arith.constant dense<0.000000e+00> : vector<8x128xf32>
    %11 = tpu.matmul %9, %10, %cst_8 {dimension_numbers = #tpu.dot_dimension_numbers<[1], [0], [0], [1], [0, 0, 1, 1], [], []>} : vector<8x256xbf16>, vector<256x128xbf16>, vector<8x128xf32> -> vector<8x128xf32>
    %c0_9 = arith.constant 0 : index
    %c0_10 = arith.constant 0 : index
    %12 = vector.load %arg7[%c0_9, %c0_10] : memref<1x128xf32, #tpu.memory_space<vmem>>, vector<1x128xf32>
    %13 = vector.broadcast %12 : vector<1x128xf32> to vector<8x128xf32>
    %14 = arith.addf %11, %13 : vector<8x128xf32>
    %c0_11 = arith.constant 0 : index
    %c0_12 = arith.constant 0 : index
    %15 = vector.load %arg2[%c0_11, %c0_12] : memref<8x4xf32, #tpu.memory_space<vmem>>, vector<8x4xf32>
    %c0_13 = arith.constant 0 : index
    %c0_14 = arith.constant 0 : index
    %16 = vector.load %arg6[%c0_13, %c0_14] : memref<4x128xf32, #tpu.memory_space<vmem>>, vector<4x128xf32>
    %17 = vector.extract_strided_slice %15 {offsets = [0, 0], sizes = [8, 1], strides = [1, 1]} : vector<8x4xf32> to vector<8x1xf32>
    %18 = vector.extract_strided_slice %16 {offsets = [0, 0], sizes = [1, 128], strides = [1, 1]} : vector<4x128xf32> to vector<1x128xf32>
    %19 = vector.broadcast %17 : vector<8x1xf32> to vector<8x128xf32>
    %20 = vector.broadcast %18 : vector<1x128xf32> to vector<8x128xf32>
    %21 = arith.mulf %19, %20 : vector<8x128xf32>
    %22 = arith.addf %14, %21 : vector<8x128xf32>
    %23 = vector.extract_strided_slice %15 {offsets = [0, 1], sizes = [8, 1], strides = [1, 1]} : vector<8x4xf32> to vector<8x1xf32>
    %24 = vector.extract_strided_slice %16 {offsets = [1, 0], sizes = [1, 128], strides = [1, 1]} : vector<4x128xf32> to vector<1x128xf32>
    %25 = vector.broadcast %23 : vector<8x1xf32> to vector<8x128xf32>
    %26 = vector.broadcast %24 : vector<1x128xf32> to vector<8x128xf32>
    %27 = arith.mulf %25, %26 : vector<8x128xf32>
    %28 = arith.addf %22, %27 : vector<8x128xf32>
    %29 = vector.extract_strided_slice %15 {offsets = [0, 2], sizes = [8, 1], strides = [1, 1]} : vector<8x4xf32> to vector<8x1xf32>
    %30 = vector.extract_strided_slice %16 {offsets = [2, 0], sizes = [1, 128], strides = [1, 1]} : vector<4x128xf32> to vector<1x128xf32>
    %31 = vector.broadcast %29 : vector<8x1xf32> to vector<8x128xf32>
    %32 = vector.broadcast %30 : vector<1x128xf32> to vector<8x128xf32>
    %33 = arith.mulf %31, %32 : vector<8x128xf32>
    %34 = arith.addf %28, %33 : vector<8x128xf32>
    %35 = vector.extract_strided_slice %15 {offsets = [0, 3], sizes = [8, 1], strides = [1, 1]} : vector<8x4xf32> to vector<8x1xf32>
    %36 = vector.extract_strided_slice %16 {offsets = [3, 0], sizes = [1, 128], strides = [1, 1]} : vector<4x128xf32> to vector<1x128xf32>
    %37 = vector.broadcast %35 : vector<8x1xf32> to vector<8x128xf32>
    %38 = vector.broadcast %36 : vector<1x128xf32> to vector<8x128xf32>
    %39 = arith.mulf %37, %38 : vector<8x128xf32>
    %40 = arith.addf %34, %39 : vector<8x128xf32>
    %cst_15 = arith.constant 0.000000e+00 : f32
    %41 = vector.broadcast %cst_15 : f32 to vector<8x128xf32>
    %42 = arith.maximumf %40, %41 : vector<8x128xf32>
    %c0_16 = arith.constant 0 : index
    %c0_17 = arith.constant 0 : index
    %43 = vector.load %arg8[%c0_16, %c0_17] : memref<1x128xf32, #tpu.memory_space<vmem>>, vector<1x128xf32>
    %44 = vector.broadcast %43 : vector<1x128xf32> to vector<8x128xf32>
    %45 = arith.mulf %42, %44 : vector<8x128xf32>
    %cst_18 = arith.constant dense<0.000000e+00> : vector<8xf32>
    %46 = vector.multi_reduction <add>, %45, %cst_18 [1] : vector<8x128xf32> to vector<8xf32>
    %47 = vector.shape_cast %46 : vector<8xf32> to vector<8x1xf32>
    %c0_19 = arith.constant 0 : index
    %c0_20 = arith.constant 0 : index
    %48 = vector.load %arg9[%c0_19, %c0_20] : memref<1x1xf32, #tpu.memory_space<vmem>>, vector<1x1xf32>
    %49 = vector.broadcast %48 : vector<1x1xf32> to vector<8x1xf32>
    %50 = arith.addf %47, %49 : vector<8x1xf32>
    %c0_21 = arith.constant 0 : index
    %c0_22 = arith.constant 0 : index
    %51 = vector.load %arg10[%c0_21, %c0_22] : memref<8x1xf32, #tpu.memory_space<vmem>>, vector<8x1xf32>
    tpu.vector_store %arg10[%c0_21, %c0_22], %50 {strides = array<i32>} : memref<8x1xf32, #tpu.memory_space<vmem>>, vector<8x1xf32>,
    return
  }
  func.func @transform_0(%arg0: i32) -> (i32, i32) {
    %c0_i32 = arith.constant 0 : i32
    %c0_i32_0 = arith.constant 0 : i32
    return %arg0, %c0_i32 : i32, i32
  }
  func.func @transform_1(%arg0: i32) -> (i32, i32) {
    %c0_i32 = arith.constant 0 : i32
    %c0_i32_0 = arith.constant 0 : i32
    return %arg0, %c0_i32 : i32, i32
  }
  func.func @transform_2(%arg0: i32) -> (i32, i32) {
    %c0_i32 = arith.constant 0 : i32
    %c0_i32_0 = arith.constant 0 : i32
    %c0_i32_1 = arith.constant 0 : i32
    return %c0_i32, %c0_i32_0 : i32, i32
  }
  func.func @transform_3(%arg0: i32) -> (i32, i32) {
    %c0_i32 = arith.constant 0 : i32
    %c0_i32_0 = arith.constant 0 : i32
    %c0_i32_1 = arith.constant 0 : i32
    return %c0_i32, %c0_i32_0 : i32, i32
  }
  func.func @transform_4(%arg0: i32) -> (i32, i32) {
    %c0_i32 = arith.constant 0 : i32
    %c0_i32_0 = arith.constant 0 : i32
    %c0_i32_1 = arith.constant 0 : i32
    return %c0_i32, %c0_i32_0 : i32, i32
  }
  func.func @transform_5(%arg0: i32) -> (i32, i32) {
    %c0_i32 = arith.constant 0 : i32
    %c0_i32_0 = arith.constant 0 : i32
    %c0_i32_1 = arith.constant 0 : i32
    return %c0_i32, %c0_i32_0 : i32, i32
  }
  func.func @transform_6(%arg0: i32) -> (i32, i32) {
    %c0_i32 = arith.constant 0 : i32
    %c0_i32_0 = arith.constant 0 : i32
    %c0_i32_1 = arith.constant 0 : i32
    return %c0_i32, %c0_i32_0 : i32, i32
  }
  func.func @transform_7(%arg0: i32) -> (i32, i32) {
    %c0_i32 = arith.constant 0 : i32
    %c0_i32_0 = arith.constant 0 : i32
    %c0_i32_1 = arith.constant 0 : i32
    return %c0_i32, %c0_i32_0 : i32, i32
  }
  func.func @transform_8(%arg0: i32) -> (i32, i32) {
    %c0_i32 = arith.constant 0 : i32
    %c0_i32_0 = arith.constant 0 : i32
    %c0_i32_1 = arith.constant 0 : i32
    return %c0_i32, %c0_i32_0 : i32, i32
  }
  func.func @transform_9(%arg0: i32) -> (i32, i32) {
    %c0_i32 = arith.constant 0 : i32
    %c0_i32_0 = arith.constant 0 : i32
    return %arg0, %c0_i32 : i32, i32
  }
}

</mosaic_0001>

<llo_original>
// kernel: tpu_custom_call.1
$region0: #{tpu_custom_call.1}
  #allocation0 [shape = 'u32[]', space=smem, size = 0x4, offset = 0x4, fixed_abs, tag = 'smem constant byte address 0x4 - core index']
  #allocation1 [shape = 'u32[144,128]{1,0:T(1,128)}', space=vmem, size = 0x12000, scoped, tag = 'internal scratch']
  #allocation2 [shape = 'f32[1,1]{1,0:T(1,128)S(1)}', space=vmem, size = 0x200, scoped, tag = 'scoped memory for tpu_custom_call.1']
  %s0 = inlined_call_operand.vmem [shape: f32[8,48], index: 0, kind: input, shape index: {}]
  %s1 = inlined_call_operand.vmem [shape: f32[8,4], index: 1, kind: input, shape index: {}]
  %s2 = inlined_call_operand.hbm [shape: bf16[48,256], index: 2, kind: input, shape index: {}]
  %s3 = inlined_call_operand.vmem [shape: f32[1,256], index: 3, kind: input, shape index: {}]
  %s4 = inlined_call_operand.hbm [shape: bf16[256,128], index: 4, kind: input, shape index: {}]
  %s5 = inlined_call_operand.vmem [shape: f32[4,128], index: 5, kind: input, shape index: {}]
  %s6 = inlined_call_operand.vmem [shape: f32[1,128], index: 6, kind: input, shape index: {}]
  %s7 = inlined_call_operand.vmem [shape: f32[1,128], index: 7, kind: input, shape index: {}]
  %s8 = inlined_call_operand.<no memory space> [shape: f32[1,1], index: 8, kind: input, shape index: {}]
  %s9 = inlined_call_operand.vmem [shape: f32[8,1], index: 9, kind: output, shape index: {}]
  %s10 = sld [smem:[#allocation0]]
  $region54: #{tpu_custom_call.1} parent=0
    _
  %s12 = ssub.s32 1, %s10
  %s13 = scalar_select 0, %s12, %s10
  %v14 = vstv %s8
  %15 = vst [vmem:[#allocation2] sm:$0x1] %v14
  $region1: #{tpu_custom_call.1} parent=0
    #allocation3 [shape = 'u8[24576]{0}', space=vmem, size = 0x6000, scoped, tag = 'input window, operand 2, single buffered']
    #allocation4 [shape = 's32[1]{0}', space=sflag, size = 0x4, scoped, tag = 'scoped memory for tpu_custom_call.1']
    #allocation5 [shape = 'u8[65536]{0}', space=vmem, size = 0x10000, scoped, tag = 'input window, operand 4, single buffered']
    #allocation6 [shape = 's32[1]{0}', space=sflag, size = 0x4, scoped, tag = 'scoped memory for tpu_custom_call.1']
    %16 = vsyncpa [#allocation4], 0
    %17 = vsyncpa [#allocation6], 0
    // Predicated region
    $region2: #{tpu_custom_call.1} parent=1 // pred_check
      _
    $region3: #{tpu_custom_call.1} parent=1 // pred_check_branch
      %19 = sbr.rel (0) target = $region5
    $region4: #{tpu_custom_call.1} parent=1 // pred_region
      _
    $region5: #{tpu_custom_call.1} parent=1 // pred_fallthru
      _
    // Predicated region
    $region6: #{tpu_custom_call.1} parent=1 // pred_check
      _
    $region7: #{tpu_custom_call.1} parent=1 // pred_check_branch
      %21 = sbr.rel (0) target = $region9
    $region8: #{tpu_custom_call.1} parent=1 // pred_region
      _
    $region9: #{tpu_custom_call.1} parent=1 // pred_fallthru
      _
    // Predicated region
    $region10: #{tpu_custom_call.1} parent=1 // pred_check
      _
    $region11: #{tpu_custom_call.1} parent=1 // pred_check_branch
      %23 = sbr.rel (0) target = $region13
    $region12: #{tpu_custom_call.1} parent=1 // pred_region
      %s25 = ssub.s32 768, 768
      %26 = vsyncadd [#allocation4], %s25
      %s27 = sshll.u32 [#allocation3], 4
      %s28 = int_to_ptr.vmem [resolvable:$true] %s27
      %33 = dma.hbm_to_vmem [thread:$0]  %s2, 768, %s28, [#allocation4], 128, 128, 8
    $region13: #{tpu_custom_call.1} parent=1 // pred_fallthru
      _
    // Predicated region
    $region14: #{tpu_custom_call.1} parent=1 // pred_check
      _
    $region15: #{tpu_custom_call.1} parent=1 // pred_check_branch
      %35 = sbr.rel (0) target = $region17
    $region16: #{tpu_custom_call.1} parent=1 // pred_region
      _
    $region17: #{tpu_custom_call.1} parent=1 // pred_fallthru
      _
    // Predicated region
    $region18: #{tpu_custom_call.1} parent=1 // pred_check
      _
    $region19: #{tpu_custom_call.1} parent=1 // pred_check_branch
      %37 = sbr.rel (0) target = $region21
    $region20: #{tpu_custom_call.1} parent=1 // pred_region
      %s39 = ssub.s32 2048, 2048
      %40 = vsyncadd [#allocation6], %s39
      %s41 = sshll.u32 [#allocation5], 4
      %s42 = int_to_ptr.vmem [resolvable:$true] %s41
      %47 = dma.hbm_to_vmem [thread:$0]  %s4, 2048, %s42, [#allocation6], 64, 64, 4
    $region21: #{tpu_custom_call.1} parent=1 // pred_fallthru
      _
    // Predicated region
    $region22: #{tpu_custom_call.1} parent=1 // pred_check
      _
    $region23: #{tpu_custom_call.1} parent=1 // pred_check_branch
      %49 = sbr.rel (0) target = $region25
    $region24: #{tpu_custom_call.1} parent=1 // pred_region
      _
    $region25: #{tpu_custom_call.1} parent=1 // pred_fallthru
      _
    // Predicated region
    $region26: #{tpu_custom_call.1} parent=1 // pred_check
      _
    $region27: #{tpu_custom_call.1} parent=1 // pred_check_branch
      %51 = sbr.rel (0) target = $region29
    $region28: #{tpu_custom_call.1} parent=1 // pred_region
      _
    $region29: #{tpu_custom_call.1} parent=1 // pred_fallthru
      _
    // Predicated region
    $region30: #{tpu_custom_call.1} parent=1 // pred_check
      _
    $region31: #{tpu_custom_call.1} parent=1 // pred_check_branch
      %53 = sbr.rel (0) target = $region33
    $region32: #{tpu_custom_call.1} parent=1 // pred_region
      _
    $region33: #{tpu_custom_call.1} parent=1 // pred_fallthru
      _
    // Predicated region
    $region34: #{tpu_custom_call.1} parent=1 // pred_check
      _
    $region35: #{tpu_custom_call.1} parent=1 // pred_check_branch
      %55 = sbr.rel (0) target = $region37
    $region36: #{tpu_custom_call.1} parent=1 // pred_region
      _
    $region37: #{tpu_custom_call.1} parent=1 // pred_fallthru
      _
    // Predicated region
    $region38: #{tpu_custom_call.1} parent=1 // pred_check
      _
    $region39: #{tpu_custom_call.1} parent=1 // pred_check_branch
      %57 = sbr.rel (0) target = $region41
    $region40: #{tpu_custom_call.1} parent=1 // pred_region
      %58 = dma.done [#allocation4], 768
    $region41: #{tpu_custom_call.1} parent=1 // pred_fallthru
      _
    // Predicated region
    $region42: #{tpu_custom_call.1} parent=1 // pred_check
      _
    $region43: #{tpu_custom_call.1} parent=1 // pred_check_branch
      %60 = sbr.rel (0) target = $region45
    $region44: #{tpu_custom_call.1} parent=1 // pred_region
      %61 = dma.done [#allocation6], 2048
    $region45: #{tpu_custom_call.1} parent=1 // pred_fallthru
      _
    %v63 = vld [vmem:[%s0] sm:$0xff]
    %v64 = vpack.c.bf16 %v63, %v63
    %v65 = vld [vmem:[#allocation3] sm:$0xff]
    %v66 = vld [vmem:[#allocation3 + $0x8] sm:$0xff]
    %v67 = vld [vmem:[#allocation3 + $0x10] sm:$0xff]
    %v68 = vld [vmem:[#allocation3 + $0x18] sm:$0xff]
    %v69 = vld [vmem:[#allocation3 + $0x20] sm:$0xff]
    %v70 = vld [vmem:[#allocation3 + $0x28] sm:$0xff]
    %v71 = vld [vmem:[%s3] sm:$0x3]
    %v73 = vlaneseq
    %v74 = vshrl.u32 %v73, 7
    %v75 = vsub.s32 0, %v74
    %v76 = vrot.slane %v71, %v75
    %v77 = vlaneseq
    %v78 = vshrl.u32 %v77, 7
    %v79 = vsub.s32 1, %v78
    %v80 = vrot.slane %v71, %v79
    %v89 = vunpack.c.l.b16 %v65
    %v90 = vunpack.c.h.b16 %v65
    %v91 = vunpack.c.l.b16 %v66
    %v92 = vunpack.c.h.b16 %v66
    %v93 = vunpack.c.l.b16 %v67
    %v94 = vunpack.c.h.b16 %v67
    %v95 = vunpack.c.l.b16 %v68
    %v96 = vunpack.c.h.b16 %v68
    %v97 = vunpack.c.l.b16 %v69
    %v98 = vunpack.c.h.b16 %v69
    %v99 = vunpack.c.l.b16 %v70
    %v100 = vunpack.c.h.b16 %v70
    %v101 = vpack.c.b16 %v91, %v89
    %v102 = vpack.c.b16 %v92, %v90
    %v103 = vpack.c.b16 %v95, %v93
    %v104 = vpack.c.b16 %v96, %v94
    %v105 = vpack.c.b16 %v99, %v97
    %v106 = vpack.c.b16 %v100, %v98
    %vm113 = vcmask 392192
    %v115 = vsel %vm113, %v64, 0
    %117 = vmatprep.subr.bf16.mxu0 %v102
    %118 = vmatpush1.bf16.msra.mxu0 %v101
    %119 = vmatprep.subr.bf16.mxu0 %v104
    %120 = vmatpush1.bf16.msra.mxu0 %v103
    %121 = vmatprep.subr.bf16.mxu0 %v106
    %122 = vmatpush1.bf16.msra.mxu0 %v105
    %123 = vmatprep.subr.bf16.mxu0 0
    %124 = vmatpush1.bf16.msra.mxu0 0
    %125 = vmatprep.subr.bf16.mxu0 0
    %126 = vmatpush1.bf16.msra.mxu0 0
    %127 = vmatprep.subr.bf16.mxu0 0
    %128 = vmatpush1.bf16.msra.mxu0 0
    %129 = vmatprep.subr.bf16.mxu0 0
    %130 = vmatpush1.bf16.msra.mxu0 0
    %131 = vmatprep.subr.bf16.mxu0 0
    %132 = vmatpush1.bf16.msra.mxu0 0
    %133 = vmatprep.subr.bf16.mxu0 0
    %134 = vmatpush1.bf16.msra.mxu0 0
    %135 = vmatprep.subr.bf16.mxu0 0
    %136 = vmatpush1.bf16.msra.mxu0 0
    %137 = vmatprep.subr.bf16.mxu0 0
    %138 = vmatpush1.bf16.msra.mxu0 0
    %139 = vmatprep.subr.bf16.mxu0 0
    %140 = vmatpush1.bf16.msra.mxu0 0
    %141 = vmatprep.subr.bf16.mxu0 0
    %142 = vmatpush1.bf16.msra.mxu0 0
    %143 = vmatprep.subr.bf16.mxu0 0
    %144 = vmatpush1.bf16.msra.mxu0 0
    %145 = vmatprep.subr.bf16.mxu0 0
    %146 = vmatpush1.bf16.msra.mxu0 0
    %147 = vmatprep.subr.bf16.mxu0 0
    %148 = vmatpush1.bf16.msra.mxu0 0
    %149 = vmatprep.mubr.bf16.mxu0 0
    %150 = vmatmul.mubr.bf16.gmra.mrb[0].mxu0 %v115
    %v151 = vpop.f32.mrb[0].mxu0
    %v152 = vadd.f32 %v76, %v151
    %v153 = vpop.f32.mrb[0].mxu0
    %v154 = vadd.f32 %v80, %v153
    %v155 = vpop.f32.mrb[0].mxu0
    %v156 = vpop.f32.mrb[0].mxu0
    %157 = vdwg.mxu0
    %v158 = vmax.f32 %v152, 0.0
    %v159 = vmax.f32 %v154, 0.0
    %v160 = vpack.c.bf16 %v158, %v158
    %v161 = vpack.c.bf16 %v159, %v159
    %v162 = vld [vmem:[#allocation5] sm:$0xf]
    %v163 = vld [vmem:[#allocation5 + $0x4] sm:$0xf]
    %v164 = vld [vmem:[#allocation5 + $0x8] sm:$0xf]
    %v165 = vld [vmem:[#allocation5 + $0xc] sm:$0xf]
    %v166 = vld [vmem:[#allocation5 + $0x10] sm:$0xf]
    %v167 = vld [vmem:[#allocation5 + $0x14] sm:$0xf]
    %v168 = vld [vmem:[#allocation5 + $0x18] sm:$0xf]
    %v169 = vld [vmem:[#allocation5 + $0x1c] sm:$0xf]
    %v170 = vld [vmem:[#allocation5 + $0x20] sm:$0xf]
    %v171 = vld [vmem:[#allocation5 + $0x24] sm:$0xf]
    %v172 = vld [vmem:[#allocation5 + $0x28] sm:$0xf]
    %v173 = vld [vmem:[#allocation5 + $0x2c] sm:$0xf]
    %v174 = vld [vmem:[#allocation5 + $0x30] sm:$0xf]
    %v175 = vld [vmem:[#allocation5 + $0x34] sm:$0xf]
    %v176 = vld [vmem:[#allocation5 + $0x38] sm:$0xf]
    %v177 = vld [vmem:[#allocation5 + $0x3c] sm:$0xf]
    %v178 = vld [vmem:[#allocation5 + $0x40] sm:$0xf]
    %v179 = vld [vmem:[#allocation5 + $0x44] sm:$0xf]
    %v180 = vld [vmem:[#allocation5 + $0x48] sm:$0xf]
    %v181 = vld [vmem:[#allocation5 + $0x4c] sm:$0xf]
    %v182 = vld [vmem:[#allocation5 + $0x50] sm:$0xf]
    %v183 = vld [vmem:[#allocation5 + $0x54] sm:$0xf]
    %v184 = vld [vmem:[#allocation5 + $0x58] sm:$0xf]
    %v185 = vld [vmem:[#allocation5 + $0x5c] sm:$0xf]
    %v186 = vld [vmem:[#allocation5 + $0x60] sm:$0xf]
    %v187 = vld [vmem:[#allocation5 + $0x64] sm:$0xf]
    %v188 = vld [vmem:[#allocation5 + $0x68] sm:$0xf]
    %v189 = vld [vmem:[#allocation5 + $0x6c] sm:$0xf]
    %v190 = vld [vmem:[#allocation5 + $0x70] sm:$0xf]
    %v191 = vld [vmem:[#allocation5 + $0x74] sm:$0xf]
    %v192 = vld [vmem:[#allocation5 + $0x78] sm:$0xf]
    %v193 = vld [vmem:[#allocation5 + $0x7c] sm:$0xf]
    %v194 = vld [vmem:[%s6] sm:$0x1]
    %v196 = vlaneseq
    %v197 = vshrl.u32 %v196, 7
    %v198 = vsub.s32 0, %v197
    %v199 = vrot.slane %v194, %v198
    %v233 = vunpack.c.l.b16 %v162
    %v234 = vunpack.c.l.b16 %v163
    %v235 = vunpack.c.l.b16 %v164
    %v236 = vunpack.c.l.b16 %v165
    %v237 = vunpack.c.l.b16 %v166
    %v238 = vunpack.c.l.b16 %v167
    %v239 = vunpack.c.l.b16 %v168
    %v240 = vunpack.c.l.b16 %v169
    %v241 = vunpack.c.l.b16 %v170
    %v242 = vunpack.c.l.b16 %v171
    %v243 = vunpack.c.l.b16 %v172
    %v244 = vunpack.c.l.b16 %v173
    %v245 = vunpack.c.l.b16 %v174
    %v246 = vunpack.c.l.b16 %v175
    %v247 = vunpack.c.l.b16 %v176
    %v248 = vunpack.c.l.b16 %v177
    %v249 = vunpack.c.l.b16 %v178
    %v250 = vunpack.c.l.b16 %v179
    %v251 = vunpack.c.l.b16 %v180
    %v252 = vunpack.c.l.b16 %v181
    %v253 = vunpack.c.l.b16 %v182
    %v254 = vunpack.c.l.b16 %v183
    %v255 = vunpack.c.l.b16 %v184
    %v256 = vunpack.c.l.b16 %v185
    %v257 = vunpack.c.l.b16 %v186
    %v258 = vunpack.c.l.b16 %v187
    %v259 = vunpack.c.l.b16 %v188
    %v260 = vunpack.c.l.b16 %v189
    %v261 = vunpack.c.l.b16 %v190
    %v262 = vunpack.c.l.b16 %v191
    %v263 = vunpack.c.l.b16 %v192
    %v264 = vunpack.c.l.b16 %v193
    %v265 = vpack.c.b16 %v234, %v233
    %v266 = vpack.c.b16 %v236, %v235
    %v267 = vpack.c.b16 %v238, %v237
    %v268 = vpack.c.b16 %v240, %v239
    %v269 = vpack.c.b16 %v242, %v241
    %v270 = vpack.c.b16 %v244, %v243
    %v271 = vpack.c.b16 %v246, %v245
    %v272 = vpack.c.b16 %v248, %v247
    %v273 = vpack.c.b16 %v250, %v249
    %v274 = vpack.c.b16 %v252, %v251
    %v275 = vpack.c.b16 %v254, %v253
    %v276 = vpack.c.b16 %v256, %v255
    %v277 = vpack.c.b16 %v258, %v257
    %v278 = vpack.c.b16 %v260, %v259
    %v279 = vpack.c.b16 %v262, %v261
    %v280 = vpack.c.b16 %v264, %v263
    %297 = vmatprep.subr.bf16.mxu0 0
    %298 = vmatpush1.bf16.msra.mxu0 %v265
    %299 = vmatprep.subr.bf16.mxu0 0
    %300 = vmatpush1.bf16.msra.mxu0 %v266
    %301 = vmatprep.subr.bf16.mxu0 0
    %302 = vmatpush1.bf16.msra.mxu0 %v267
    %303 = vmatprep.subr.bf16.mxu0 0
    %304 = vmatpush1.bf16.msra.mxu0 %v268
    %305 = vmatprep.subr.bf16.mxu0 0
    %306 = vmatpush1.bf16.msra.mxu0 %v269
    %307 = vmatprep.subr.bf16.mxu0 0
    %308 = vmatpush1.bf16.msra.mxu0 %v270
    %309 = vmatprep.subr.bf16.mxu0 0
    %310 = vmatpush1.bf16.msra.mxu0 %v271
    %311 = vmatprep.subr.bf16.mxu0 0
    %312 = vmatpush1.bf16.msra.mxu0 %v272
    %313 = vmatprep.subr.bf16.mxu0 0
    %314 = vmatpush1.bf16.msra.mxu0 %v273
    %315 = vmatprep.subr.bf16.mxu0 0
    %316 = vmatpush1.bf16.msra.mxu0 %v274
    %317 = vmatprep.subr.bf16.mxu0 0
    %318 = vmatpush1.bf16.msra.mxu0 %v275
    %319 = vmatprep.subr.bf16.mxu0 0
    %320 = vmatpush1.bf16.msra.mxu0 %v276
    %321 = vmatprep.subr.bf16.mxu0 0
    %322 = vmatpush1.bf16.msra.mxu0 %v277
    %323 = vmatprep.subr.bf16.mxu0 0
    %324 = vmatpush1.bf16.msra.mxu0 %v278
    %325 = vmatprep.subr.bf16.mxu0 0
    %326 = vmatpush1.bf16.msra.mxu0 %v279
    %327 = vmatprep.subr.bf16.mxu0 0
    %328 = vmatpush1.bf16.msra.mxu0 %v280
    %329 = vmatprep.mubr.bf16.mxu0 %v161
    %330 = vmatmul.mubr.bf16.gmra.mrb[0].mxu0 %v160
    %v331 = vpop.f32.mrb[0].mxu0
    %v332 = vadd.f32 %v199, %v331
    %v333 = vpop.f32.mrb[0].mxu0
    %v334 = vpop.f32.mrb[0].mxu0
    %v335 = vpop.f32.mrb[0].mxu0
    %336 = vdwg.mxu0
    %v337 = vld [vmem:[%s1] sm:$0xff]
    %v338 = vld [vmem:[%s5] sm:$0xf]
    %340 = vset.pattern.permute.xlu0 0
    %341 = vperm.xlu0 %340, %v337
    %v342 = vpop.permute.xlu0 %341
    %v344 = vlaneseq
    %v345 = vshrl.u32 %v344, 7
    %v346 = vsub.s32 0, %v345
    %v347 = vrot.slane %v338, %v346
    %v348 = vmul.f32 %v342, %v347
    %v349 = vadd.f32 %v332, %v348
    %350 = vset.pattern.permute.xlu0 1
    %351 = vperm.xlu0 %350, %v337
    %v352 = vpop.permute.xlu0 %351
    %v354 = vlaneseq
    %v355 = vshrl.u32 %v354, 7
    %v356 = vsub.s32 1, %v355
    %v357 = vrot.slane %v338, %v356
    %v358 = vmul.f32 %v352, %v357
    %v359 = vadd.f32 %v349, %v358
    %360 = vset.pattern.permute.xlu0 2
    %361 = vperm.xlu0 %360, %v337
    %v362 = vpop.permute.xlu0 %361
    %v364 = vlaneseq
    %v365 = vshrl.u32 %v364, 7
    %v366 = vsub.s32 2, %v365
    %v367 = vrot.slane %v338, %v366
    %v368 = vmul.f32 %v362, %v367
    %v369 = vadd.f32 %v359, %v368
    %370 = vset.pattern.permute.xlu0 3
    %371 = vperm.xlu0 %370, %v337
    %v372 = vpop.permute.xlu0 %371
    %v374 = vlaneseq
    %v375 = vshrl.u32 %v374, 7
    %v376 = vsub.s32 3, %v375
    %v377 = vrot.slane %v338, %v376
    %v378 = vmul.f32 %v372, %v377
    %v379 = vadd.f32 %v369, %v378
    %v380 = vmax.f32 %v379, 0.0
    %v381 = vld [vmem:[%s7] sm:$0x1]
    %v383 = vlaneseq
    %v384 = vshrl.u32 %v383, 7
    %v385 = vsub.s32 0, %v384
    %v386 = vrot.slane %v381, %v385
    %v388 = vmul.f32 %v380, %v386
    %389 = vadd.xlane.f32.xlu0 %v388
    %v390 = vpop.xlane.xlu0 %389
    %v391 = vld [vmem:[#allocation2] sm:$0x1]
    %v393 = vlaneseq
    %v394 = vshrl.u32 %v393, 7
    %v395 = vsub.s32 0, %v394
    %v396 = vrot.slane %v391, %v395
    %v398 = vadd.f32 %v390, %v396
    %vm399 = vcmask 7168
    %400 = vst.msk [vmem:[%s9] sm:$0xff] %vm399, %v398
    // Predicated region
    $region46: #{tpu_custom_call.1} parent=1 // pred_check
      _
    $region47: #{tpu_custom_call.1} parent=1 // pred_check_branch
      %402 = sbr.rel (0) target = $region49
    $region48: #{tpu_custom_call.1} parent=1 // pred_region
      _
    $region49: #{tpu_custom_call.1} parent=1 // pred_fallthru
      _
    // Predicated region
    $region50: #{tpu_custom_call.1} parent=1 // pred_check
      _
    $region51: #{tpu_custom_call.1} parent=1 // pred_check_branch
      %404 = sbr.rel (0) target = $region53
    $region52: #{tpu_custom_call.1} parent=1 // pred_region
      _
    $region53: #{tpu_custom_call.1} parent=1 // pred_fallthru
      _
    %405 = vsyncpa [#allocation4], 1
    %406 = vsyncpa [#allocation6], 1

</llo_original>
